<compile_context>
chip_gen: v6e
topology: v6e:2x2x1
jax: 0.10.0
libtpu: 0.0.40
codegen_flags: <defaults>
</compile_context>

<pallas_src>
import math
import functools

import jax
import jax.numpy as jnp
from jax import lax
from jax.experimental import pallas as pl
from jax.experimental.pallas import tpu as pltpu


# ----------------------------------------------------------------------------- kernels

def _accumulate(x_ref, w_ref, acc_ref, bf16_matmul):
    """acc += x_tile @ w_tile.T with the weight kept in PyTorch (N, K) layout.

    Feeds the MXU bf16 (f32 accumulation) when bf16_matmul=True.
    """
    @pl.when(pl.program_id(2) == 0)
    def _():
        acc_ref[...] = jnp.zeros_like(acc_ref)

    a = x_ref[...]
    b = w_ref[...]
    if bf16_matmul and a.dtype == jnp.float32:
        a = a.astype(jnp.bfloat16)
    if bf16_matmul and b.dtype == jnp.float32:
        b = b.astype(jnp.bfloat16)

    acc_ref[...] += lax.dot_general(
        a, b,
        dimension_numbers=(((1,), (1,)), ((), ())),   # contract K of (tm,tk) with K of (tn,tk)
        preferred_element_type=jnp.float32,
    )


def _bias_relu(acc_ref, b_ref):
    out = acc_ref[...] + b_ref[...].astype(jnp.float32)   # b_ref: (1, TN) broadcast
    return jnp.maximum(out, 0.0)


def dense_eval_kernel(x_ref, w_ref, b_ref, o_ref, acc_ref, *, bf16_matmul):
    """Linear + ReLU (dropout is identity in eval mode)."""
    _accumulate(x_ref, w_ref, acc_ref, bf16_matmul)

    @pl.when(pl.program_id(2) == pl.num_programs(2) - 1)
    def _():
        o_ref[...] = _bias_relu(acc_ref, b_ref).astype(o_ref.dtype)


def dense_train_mask_kernel(x_ref, w_ref, b_ref, m_ref, o_ref, acc_ref, *, bf16_matmul):
    """Linear + ReLU + inverted dropout with a precomputed scale mask (portable path)."""
    _accumulate(x_ref, w_ref, acc_ref, bf16_matmul)

    @pl.when(pl.program_id(2) == pl.num_programs(2) - 1)
    def _():
        out = _bias_relu(acc_ref, b_ref) * m_ref[...]
        o_ref[...] = out.astype(o_ref.dtype)


def dense_train_prng_kernel(seed_ref, x_ref, w_ref, b_ref, o_ref, acc_ref,
                            *, drop_threshold, inv_keep, bf16_matmul):
    """Linear + ReLU + inverted dropout using the TPU hardware PRNG (no mask stream)."""
    _accumulate(x_ref, w_ref, acc_ref, bf16_matmul)

    # Per-output-tile seed computed at kernel top level (NOT inside pl.when), mixed
    # with a large odd constant so tiles don't get consecutive PRNG seeds.
    tile_id = pl.program_id(0) * pl.num_programs(1) + pl.program_id(1)
    tile_seed = seed_ref[0] + (tile_id + jnp.int32(1)) * jnp.int32(0x27D4EB2F)

    @pl.when(pl.program_id(2) == pl.num_programs(2) - 1)
    def _():
        out = _bias_relu(acc_ref, b_ref)
        pltpu.prng_seed(tile_seed)
        bits = pltpu.bitcast(pltpu.prng_random_bits(out.shape), jnp.int32)
        u = jnp.bitwise_and(bits, jnp.int32(0x7FFFFFFF))   # uniform in [0, 2^31)
        keep = u >= jnp.int32(drop_threshold)               # drop iff u < p * 2^31
        out = jnp.where(keep, out * jnp.float32(inv_keep), 0.0)
        o_ref[...] = out.astype(o_ref.dtype)


# ----------------------------------------------------------------------------- wrapper

def _round_up(x, m):
    return (x + m - 1) // m * m


def _pick_tile(limit, padded_dim, align):
    """Largest multiple of `align` that is <= min(limit, padded_dim) and divides padded_dim."""
    t = max(align, (min(limit, padded_dim) // align) * align)
    while padded_dim % t:
        t -= align
    return t


def dense_forward(x, weight, bias, *, p=0.2, train=False, seed=0,
                  tm=512, tk=1024, tn=1024,
                  bf16_matmul=True, use_hw_prng=None,
                  vmem_limit_bytes=64 * 1024 * 1024):
    """PyTorch-style Dense forward: Dropout(ReLU(x @ weight.T + bias)).

    x:      (..., in_features)
    weight: (out_features, in_features)   -- PyTorch nn.Linear layout (not transposed here)
    bias:   (out_features,)
    Returns (..., out_features).
    """
    *lead, K = x.shape
    N, K_w = weight.shape
    assert K_w == K, "weight/in_features mismatch"
    M = int(math.prod(lead)) if lead else 1

    # ---- tile selection -------------------------------------------------------
    M8 = _round_up(max(M, 1), 8)
    K128 = _round_up(K, 128)
    N128 = _round_up(N, 128)

    tm_eff = min(tm, M8)                       # multiple of 8 (or full M8)
    tk_eff = _pick_tile(tk, K128, 128)         # divides K128 -> no K over-padding
    tn_eff = _pick_tile(tn, N128, 128)         # divides N128 -> no N over-padding

    Mp = _round_up(M, tm_eff)
    Kp, Np = K128, N128
    grid_m = Mp // tm_eff
    if grid_m == 1 and Np > 128:
        # Only one M tile: make sure the N axis has >= 2 tiles so both v7x
        # TensorCores get work under dimension_semantics=("parallel", ...).
        tn_eff = _pick_tile(max(128, _round_up(Np // 2, 128)), Np, 128)
    grid = (grid_m, Np // tn_eff, Kp // tk_eff)
    grid_m, grid_n, grid_k = grid

    # ---- (conditional) padding -- skipped entirely for aligned shapes ---------
    x2 = x.reshape(M, K)
    if Mp > M or Kp > K:
        x2 = jnp.pad(x2, ((0, Mp - M), (0, Kp - K)))
    w2 = weight                                   # stays in (N, K) layout, no transpose
    if Np > N or Kp > K:
        w2 = jnp.pad(weight, ((0, Np - N), (0, Kp - K)))
    b2 = bias.reshape(1, N)
    if Np > N:
        b2 = jnp.pad(b2, ((0, 0), (0, Np - N)))

    # ---- specs ----------------------------------------------------------------
    x_spec = pl.BlockSpec((tm_eff, tk_eff), lambda i, j, k, *_: (i, k))
    w_spec = pl.BlockSpec((tn_eff, tk_eff), lambda i, j, k, *_: (j, k))   # (N, K) blocks
    b_spec = pl.BlockSpec((1, tn_eff), lambda i, j, k, *_: (0, j))
    m_spec = pl.BlockSpec((tm_eff, tn_eff), lambda i, j, k, *_: (i, j))
    o_spec = pl.BlockSpec((tm_eff, tn_eff), lambda i, j, k, *_: (i, j))
    scratch_shapes = [pltpu.VMEM((tm_eff, tn_eff), jnp.float32)]

    do_dropout = bool(train) and p > 0.0
    if use_hw_prng is None:
        use_hw_prng = jax.default_backend() == "tpu"

    itemsize = jnp.dtype(x.dtype).itemsize
    bytes_accessed = (Mp * Kp * grid_n + Kp * Np * grid_m + Mp * Np) * itemsize
    if do_dropout and not use_hw_prng:
        bytes_accessed += Mp * Np * 4             # streamed dropout mask
    cost = pl.CostEstimate(flops=2 * Mp * Kp * Np, transcendentals=0,
                           bytes_accessed=int(bytes_accessed))
    cparams = pltpu.CompilerParams(
        dimension_semantics=("parallel", "parallel", "arbitrary"),
        vmem_limit_bytes=vmem_limit_bytes,
    )

    # ---- kernel / grid-spec selection -----------------------------------------
    if do_dropout and use_hw_prng:
        kernel = functools.partial(
            dense_train_prng_kernel,
            drop_threshold=int(p * (2 ** 31)),
            inv_keep=float(1.0 / (1.0 - p)),
            bf16_matmul=bf16_matmul,
        )
        grid_spec = pltpu.PrefetchScalarGridSpec(
            num_scalar_prefetch=1, grid=grid,
            in_specs=[x_spec, w_spec, b_spec], out_specs=o_spec,
            scratch_shapes=scratch_shapes)
        args = (jnp.asarray([seed], dtype=jnp.int32), x2, w2, b2)
    elif do_dropout:
        # Portable dropout path (non-TPU backends / interpret mode): precomputed
        # inverted-dropout scale mask streamed like the output tile.
        # TODO(synk): mask bits come from jax.random (not PyTorch's RNG stream);
        # statistically equivalent inverted dropout.
        keep = jax.random.bernoulli(jax.random.PRNGKey(int(seed)), 1.0 - p, (Mp, Np))
        mask = jnp.where(keep, jnp.float32(1.0 / (1.0 - p)), jnp.float32(0.0))
        kernel = functools.partial(dense_train_mask_kernel, bf16_matmul=bf16_matmul)
        grid_spec = pltpu.PrefetchScalarGridSpec(
            num_scalar_prefetch=0, grid=grid,
            in_specs=[x_spec, w_spec, b_spec, m_spec], out_specs=o_spec,
            scratch_shapes=scratch_shapes)
        args = (x2, w2, b2, mask)
    else:
        kernel = functools.partial(dense_eval_kernel, bf16_matmul=bf16_matmul)
        grid_spec = pltpu.PrefetchScalarGridSpec(
            num_scalar_prefetch=0, grid=grid,
            in_specs=[x_spec, w_spec, b_spec], out_specs=o_spec,
            scratch_shapes=scratch_shapes)
        args = (x2, w2, b2)

    out_padded = pl.pallas_call(
        kernel,
        out_shape=jax.ShapeDtypeStruct((Mp, Np), x.dtype),
        grid_spec=grid_spec,
        compiler_params=cparams,
        cost_estimate=cost,
    )(*args)

    out = out_padded if (Mp == M and Np == N) else out_padded[:M, :N]
    return out.reshape(*lead, N)


# ----------------------------------------------------------------------------- init & test

def init_params(in_features, out_features, key):
    # PyTorch nn.Linear default init: U(-1/sqrt(fan_in), 1/sqrt(fan_in)).
    kw, kb = jax.random.split(key)
    bound = 1.0 / math.sqrt(in_features)
    weight = jax.random.uniform(kw, (out_features, in_features), jnp.float32,
                                minval=-bound, maxval=bound)
    bias = jax.random.uniform(kb, (out_features,), jnp.float32,
                              minval=-bound, maxval=bound)
    return weight, bias


if __name__ == "__main__":
    key = jax.random.PRNGKey(0)
    kx, kp, kx2, kp2 = jax.random.split(key, 4)

    # Small, lane-dense shapes (RNN-head style: batch x seq x hidden).
    B, S, IN, OUT = 4, 8, 128, 128
    x = jax.random.normal(kx, (B, S, IN), jnp.float32)
    weight, bias = init_params(IN, OUT, kp)

    # Eval mode (dropout is identity, matches nn.Dropout.eval()).
    out = jax.block_until_ready(dense_forward(x, weight, bias, p=0.2, train=False))
    ref = jnp.maximum(jnp.einsum("bsi,oi->bso", x, weight) + bias, 0.0)
    assert out.shape == ref.shape
    # MXU is fed bf16 -> compare against the f32 reference with bf16-level tolerance.
    assert jnp.allclose(out, ref, atol=2e-2, rtol=2e-2), "eval mismatch vs reference"

    # Unaligned shapes exercise the padding path.
    B2, S2, IN2, OUT2 = 2, 10, 50, 33
    x2 = jax.random.normal(kx2, (B2, S2, IN2), jnp.float32)
    w2, b2 = init_params(IN2, OUT2, kp2)
    out2 = jax.block_until_ready(dense_forward(x2, w2, b2, p=0.2, train=False))
    ref2 = jnp.maximum(jnp.einsum("bsi,oi->bso", x2, w2) + b2, 0.0)
    assert jnp.allclose(out2, ref2, atol=2e-2, rtol=2e-2), "unaligned mismatch"

    # Training mode exercises the fused inverted-dropout epilogue.
    # TODO(synk): dropout mask bits differ from PyTorch's RNG stream (statistically
    # equivalent inverted dropout from the TPU HW PRNG / jax.random).
    p_drop = 0.2
    out_tr = jax.block_until_ready(
        dense_forward(x, weight, bias, p=p_drop, train=True, seed=1234))
    assert out_tr.shape == ref.shape
    assert bool(jnp.all(jnp.isfinite(out_tr)))
    # Each element is either dropped (0) or the eval activation scaled by 1/(1-p).
    scaled = out / (1.0 - p_drop)
    ok = (jnp.isclose(out_tr, 0.0, atol=1e-6)
          | jnp.isclose(out_tr, scaled, rtol=1e-4, atol=1e-5))
    assert bool(jnp.all(ok)), "dropout output is not {0, x/(1-p)}"

    print("KERNEL_OK")
</pallas_src>

<mosaic_0001>
module attributes {stable_mosaic.version = 11 : i64} {
  func.func @dense_eval_kernel(%arg0: i32, %arg1: i32, %arg2: i32, %arg3: memref<32x128xf32, #tpu.memory_space<vmem>>, %arg4: memref<128x128xf32, #tpu.memory_space<vmem>>, %arg5: memref<1x128xf32, #tpu.memory_space<vmem>>, %arg6: memref<32x128xf32, #tpu.memory_space<vmem>>, %arg7: memref<32x128xf32, #tpu.memory_space<vmem>>) attributes {dimension_semantics = [#tpu.dimension_semantics<parallel>, #tpu.dimension_semantics<parallel>, #tpu.dimension_semantics<arbitrary>], iteration_bounds = array<i64: 1, 1, 1>, scalar_prefetch = 0 : i64, scratch_operands = 1 : i64, tpu.core_type = #tpu.core_type<tc>, window_params = [{transform_indices = @transform_0, window_bounds = array<i64: 32, 128>}, {transform_indices = @transform_1, window_bounds = array<i64: 128, 128>}, {transform_indices = @transform_2, window_bounds = array<i64: 1, 128>}, {transform_indices = @transform_3, window_bounds = array<i64: 32, 128>}]} {
    %c0_i32 = arith.constant 0 : i32
    %0 = arith.cmpi eq, %arg2, %c0_i32 : i32
    %1 = arith.extui %0 : i1 to i32
    %c0_i32_0 = arith.constant 0 : i32
    %2 = arith.cmpi ne, %1, %c0_i32_0 : i32
    scf.if %2 {
      %cst_10 = arith.constant 0.000000e+00 : f32
      %14 = vector.broadcast %cst_10 : f32 to vector<32x128xf32>
      %c0_11 = arith.constant 0 : index
      %c0_12 = arith.constant 0 : index
      %15 = vector.load %arg7[%c0_11, %c0_12] : memref<32x128xf32, #tpu.memory_space<vmem>>, vector<32x128xf32>
      tpu.vector_store %arg7[%c0_11, %c0_12], %14 {strides = array<i32>} : memref<32x128xf32, #tpu.memory_space<vmem>>, vector<32x128xf32>,
    } else {
    }
    %c0 = arith.constant 0 : index
    %c0_1 = arith.constant 0 : index
    %3 = vector.load %arg3[%c0, %c0_1] : memref<32x128xf32, #tpu.memory_space<vmem>>, vector<32x128xf32>
    %c0_2 = arith.constant 0 : index
    %c0_3 = arith.constant 0 : index
    %4 = vector.load %arg4[%c0_2, %c0_3] : memref<128x128xf32, #tpu.memory_space<vmem>>, vector<128x128xf32>
    %5 = arith.truncf %3 : vector<32x128xf32> to vector<32x128xbf16>
    %6 = arith.truncf %4 : vector<128x128xf32> to vector<128x128xbf16>
    %c0_4 = arith.constant 0 : index
    %c0_5 = arith.constant 0 : index
    %7 = vector.load %arg7[%c0_4, %c0_5] : memref<32x128xf32, #tpu.memory_space<vmem>>, vector<32x128xf32>
    %cst = arith.constant dense<0.000000e+00> : vector<32x128xf32>
    %8 = tpu.matmul %5, %6, %cst {dimension_numbers = #tpu.dot_dimension_numbers<[1], [1], [0], [0], [0, 0, 1, 0], [], []>} : vector<32x128xbf16>, vector<128x128xbf16>, vector<32x128xf32> -> vector<32x128xf32>
    %9 = arith.addf %7, %8 : vector<32x128xf32>
    %c0_6 = arith.constant 0 : index
    %c0_7 = arith.constant 0 : index
    %10 = vector.load %arg7[%c0_6, %c0_7] : memref<32x128xf32, #tpu.memory_space<vmem>>, vector<32x128xf32>
    tpu.vector_store %arg7[%c0_6, %c0_7], %9 {strides = array<i32>} : memref<32x128xf32, #tpu.memory_space<vmem>>, vector<32x128xf32>,
    %c0_i32_8 = arith.constant 0 : i32
    %11 = arith.cmpi eq, %arg2, %c0_i32_8 : i32
    %12 = arith.extui %11 : i1 to i32
    %c0_i32_9 = arith.constant 0 : i32
    %13 = arith.cmpi ne, %12, %c0_i32_9 : i32
    scf.if %13 {
      %c0_10 = arith.constant 0 : index
      %c0_11 = arith.constant 0 : index
      %14 = vector.load %arg7[%c0_10, %c0_11] : memref<32x128xf32, #tpu.memory_space<vmem>>, vector<32x128xf32>
      %c0_12 = arith.constant 0 : index
      %c0_13 = arith.constant 0 : index
      %15 = vector.load %arg5[%c0_12, %c0_13] : memref<1x128xf32, #tpu.memory_space<vmem>>, vector<1x128xf32>
      %16 = vector.broadcast %15 : vector<1x128xf32> to vector<32x128xf32>
      %17 = arith.addf %14, %16 : vector<32x128xf32>
      %cst_14 = arith.constant 0.000000e+00 : f32
      %18 = vector.broadcast %cst_14 : f32 to vector<32x128xf32>
      %19 = arith.maximumf %17, %18 : vector<32x128xf32>
      %c0_15 = arith.constant 0 : index
      %c0_16 = arith.constant 0 : index
      %20 = vector.load %arg6[%c0_15, %c0_16] : memref<32x128xf32, #tpu.memory_space<vmem>>, vector<32x128xf32>
      tpu.vector_store %arg6[%c0_15, %c0_16], %19 {strides = array<i32>} : memref<32x128xf32, #tpu.memory_space<vmem>>, vector<32x128xf32>,
    } else {
    }
    return
  }
  func.func @transform_0(%arg0: i32, %arg1: i32, %arg2: i32) -> (i32, i32) {
    %c0_i32 = arith.constant 0 : i32
    return %arg0, %arg2 : i32, i32
  }
  func.func @transform_1(%arg0: i32, %arg1: i32, %arg2: i32) -> (i32, i32) {
    %c0_i32 = arith.constant 0 : i32
    return %arg1, %arg2 : i32, i32
  }
  func.func @transform_2(%arg0: i32, %arg1: i32, %arg2: i32) -> (i32, i32) {
    %c0_i32 = arith.constant 0 : i32
    %c0_i32_0 = arith.constant 0 : i32
    return %c0_i32, %arg1 : i32, i32
  }
  func.func @transform_3(%arg0: i32, %arg1: i32, %arg2: i32) -> (i32, i32) {
    %c0_i32 = arith.constant 0 : i32
    return %arg0, %arg1 : i32, i32
  }
}

</mosaic_0001>

<llo_original>
// kernel: tpu_custom_call.1
$region0: #{tpu_custom_call.1}
  #allocation0 [shape = 'u32[]', space=smem, size = 0x4, offset = 0x4, fixed_abs, tag = 'smem constant byte address 0x4 - core index']
  #allocation1 [shape = 'u32[144,128]{1,0:T(1,128)}', space=vmem, size = 0x12000, scoped, tag = 'internal scratch']
  #allocation2 [shape = 'f32[32,128]{1,0:T(8,128)}', space=vmem, size = 0x4000, scoped, tag = 'scratch operand']
  %s0 = inlined_call_operand.hbm [shape: f32[32,128], index: 0, kind: input, shape index: {}]
  %s1 = inlined_call_operand.hbm [shape: f32[128,128], index: 1, kind: input, shape index: {}]
  %s2 = inlined_call_operand.vmem [shape: f32[1,128], index: 2, kind: input, shape index: {}]
  %s3 = inlined_call_operand.hbm [shape: f32[32,128], index: 3, kind: output, shape index: {}]
  %s4 = sld [smem:[#allocation0]]
  $region38: #{tpu_custom_call.1} parent=0
    _
  %s6 = ssub.s32 1, %s4
  %s7 = scalar_select 0, %s6, %s4
  $region1: #{tpu_custom_call.1} parent=0
    #allocation3 [shape = 'u8[16384]{0}', space=vmem, size = 0x4000, scoped, tag = 'input window, operand 0, single buffered']
    #allocation4 [shape = 's32[1]{0}', space=sflag, size = 0x4, scoped, tag = 'scoped memory for tpu_custom_call.1']
    #allocation5 [shape = 's32[1]{0}', space=sflag, size = 0x4, scoped, tag = 'scoped memory for tpu_custom_call.1']
    #allocation6 [shape = 'u8[65536]{0}', space=vmem, size = 0x10000, scoped, tag = 'input window, operand 1, single buffered']
    #allocation7 [shape = 's32[1]{0}', space=sflag, size = 0x4, scoped, tag = 'scoped memory for tpu_custom_call.1']
    #allocation8 [shape = 'u8[16384]{0}', space=vmem, size = 0x4000, scoped, tag = 'output window, operand 0, single buffered']
    %8 = vsyncpa [#allocation4], 0
    %9 = vsyncpa [#allocation7], 0
    %10 = vsyncpa [#allocation5], 0
    // Predicated region
    $region2: #{tpu_custom_call.1} parent=1 // pred_check
      _
    $region3: #{tpu_custom_call.1} parent=1 // pred_check_branch
      %12 = sbr.rel (0) target = $region5
    $region4: #{tpu_custom_call.1} parent=1 // pred_region
      %s14 = ssub.s32 512, 512
      %15 = vsyncadd [#allocation4], %s14
      %s16 = sshll.u32 [#allocation3], 4
      %s17 = int_to_ptr.vmem [resolvable:$true] %s16
      %22 = dma.hbm_to_vmem [thread:$0]  %s0, 512, %s17, [#allocation4], 128, 128, 8
    $region5: #{tpu_custom_call.1} parent=1 // pred_fallthru
      _
    // Predicated region
    $region6: #{tpu_custom_call.1} parent=1 // pred_check
      _
    $region7: #{tpu_custom_call.1} parent=1 // pred_check_branch
      %24 = sbr.rel (0) target = $region9
    $region8: #{tpu_custom_call.1} parent=1 // pred_region
      %s26 = ssub.s32 2048, 2048
      %27 = vsyncadd [#allocation7], %s26
      %s28 = sshll.u32 [#allocation6], 4
      %s29 = int_to_ptr.vmem [resolvable:$true] %s28
      %34 = dma.hbm_to_vmem [thread:$0]  %s1, 2048, %s29, [#allocation7], 128, 128, 8
    $region9: #{tpu_custom_call.1} parent=1 // pred_fallthru
      _
    // Predicated region
    $region10: #{tpu_custom_call.1} parent=1 // pred_check
      _
    $region11: #{tpu_custom_call.1} parent=1 // pred_check_branch
      %36 = sbr.rel (0) target = $region13
    $region12: #{tpu_custom_call.1} parent=1 // pred_region
      _
    $region13: #{tpu_custom_call.1} parent=1 // pred_fallthru
      _
    // Predicated region
    $region14: #{tpu_custom_call.1} parent=1 // pred_check
      _
    $region15: #{tpu_custom_call.1} parent=1 // pred_check_branch
      %38 = sbr.rel (0) target = $region17
    $region16: #{tpu_custom_call.1} parent=1 // pred_region
      %39 = dma.done [#allocation4], 512
    $region17: #{tpu_custom_call.1} parent=1 // pred_fallthru
      _
    // Predicated region
    $region18: #{tpu_custom_call.1} parent=1 // pred_check
      _
    $region19: #{tpu_custom_call.1} parent=1 // pred_check_branch
      %41 = sbr.rel (0) target = $region21
    $region20: #{tpu_custom_call.1} parent=1 // pred_region
      %42 = dma.done [#allocation7], 2048
    $region21: #{tpu_custom_call.1} parent=1 // pred_fallthru
      _
    %p44 = scmp.eq.s32.totalorder 0, 0
    // Predicated region
    $region22: #{tpu_custom_call.1} parent=1 // pred_check
      %p45 = pneg %p44
    $region23: #{tpu_custom_call.1} parent=1 // pred_check_branch
      %47 = sbr.rel (%p45) target = $region25
    $region24: #{tpu_custom_call.1} parent=1 // pred_region
      %48 = vst [vmem:[#allocation2] sm:$0xff] 0.0
      %49 = vst [vmem:[#allocation2 + $0x8] sm:$0xff] 0.0
      %50 = vst [vmem:[#allocation2 + $0x10] sm:$0xff] 0.0
      %51 = vst [vmem:[#allocation2 + $0x18] sm:$0xff] 0.0
    $region25: #{tpu_custom_call.1} parent=1 // pred_fallthru
      _
    %v52 = vld [vmem:[#allocation3] sm:$0xff]
    %v53 = vld [vmem:[#allocation3 + $0x8] sm:$0xff]
    %v54 = vld [vmem:[#allocation3 + $0x10] sm:$0xff]
    %v55 = vld [vmem:[#allocation3 + $0x18] sm:$0xff]
    %v56 = vld [vmem:[#allocation6] sm:$0xff]
    %v57 = vld [vmem:[#allocation6 + $0x8] sm:$0xff]
    %v58 = vld [vmem:[#allocation6 + $0x10] sm:$0xff]
    %v59 = vld [vmem:[#allocation6 + $0x18] sm:$0xff]
    %v60 = vld [vmem:[#allocation6 + $0x20] sm:$0xff]
    %v61 = vld [vmem:[#allocation6 + $0x28] sm:$0xff]
    %v62 = vld [vmem:[#allocation6 + $0x30] sm:$0xff]
    %v63 = vld [vmem:[#allocation6 + $0x38] sm:$0xff]
    %v64 = vld [vmem:[#allocation6 + $0x40] sm:$0xff]
    %v65 = vld [vmem:[#allocation6 + $0x48] sm:$0xff]
    %v66 = vld [vmem:[#allocation6 + $0x50] sm:$0xff]
    %v67 = vld [vmem:[#allocation6 + $0x58] sm:$0xff]
    %v68 = vld [vmem:[#allocation6 + $0x60] sm:$0xff]
    %v69 = vld [vmem:[#allocation6 + $0x68] sm:$0xff]
    %v70 = vld [vmem:[#allocation6 + $0x70] sm:$0xff]
    %v71 = vld [vmem:[#allocation6 + $0x78] sm:$0xff]
    %v72 = vpack.c.bf16 %v53, %v52
    %v73 = vpack.c.bf16 %v55, %v54
    %v74 = vpack.c.bf16 %v57, %v56
    %v75 = vpack.c.bf16 %v59, %v58
    %v76 = vpack.c.bf16 %v61, %v60
    %v77 = vpack.c.bf16 %v63, %v62
    %v78 = vpack.c.bf16 %v65, %v64
    %v79 = vpack.c.bf16 %v67, %v66
    %v80 = vpack.c.bf16 %v69, %v68
    %v81 = vpack.c.bf16 %v71, %v70
    %v82 = vld [vmem:[#allocation2] sm:$0xff]
    %v83 = vld [vmem:[#allocation2 + $0x8] sm:$0xff]
    %v84 = vld [vmem:[#allocation2 + $0x10] sm:$0xff]
    %v85 = vld [vmem:[#allocation2 + $0x18] sm:$0xff]
    %86 = vmatprep.subr.bf16.mxu0 0
    %87 = vmatpush1.bf16.xpose.msra.mxu0 %v81
    %88 = vmatprep.subr.bf16.mxu0 0
    %89 = vmatpush1.bf16.xpose.msra.mxu0 %v80
    %90 = vmatprep.subr.bf16.mxu0 0
    %91 = vmatpush1.bf16.xpose.msra.mxu0 %v79
    %92 = vmatprep.subr.bf16.mxu0 0
    %93 = vmatpush1.bf16.xpose.msra.mxu0 %v78
    %94 = vmatprep.subr.bf16.mxu0 0
    %95 = vmatpush1.bf16.xpose.msra.mxu0 %v77
    %96 = vmatprep.subr.bf16.mxu0 0
    %97 = vmatpush1.bf16.xpose.msra.mxu0 %v76
    %98 = vmatprep.subr.bf16.mxu0 0
    %99 = vmatpush1.bf16.xpose.msra.mxu0 %v75
    %100 = vmatprep.subr.bf16.mxu0 0
    %101 = vmatpush1.bf16.xpose.msra.mxu0 %v74
    %102 = vmatprep.subr.bf16.mxu0 0
    %103 = vmatpush2.bf16.xpose.msra.mxu0 0
    %104 = vmatprep.subr.bf16.mxu0 0
    %105 = vmatpush2.bf16.xpose.msra.mxu0 0
    %106 = vmatprep.subr.bf16.mxu0 0
    %107 = vmatpush2.bf16.xpose.msra.mxu0 0
    %108 = vmatprep.subr.bf16.mxu0 0
    %109 = vmatpush2.bf16.xpose.msra.mxu0 0
    %110 = vmatprep.subr.bf16.mxu0 0
    %111 = vmatpush2.bf16.xpose.msra.mxu0 0
    %112 = vmatprep.subr.bf16.mxu0 0
    %113 = vmatpush2.bf16.xpose.msra.mxu0 0
    %114 = vmatprep.subr.bf16.mxu0 0
    %115 = vmatpush2.bf16.xpose.msra.mxu0 0
    %116 = vmatprep.subr.bf16.mxu0 0
    %117 = vmatpush2.bf16.xpose.msra.mxu0 0
    %118 = vmatprep.mubr.bf16.mxu0 0
    %119 = vmatmul.mubr.bf16.gmra.mxu0 %v72
    %v120 = vpop.f32.mrf.mxu0
    %v121 = vadd.f32 0.0, %v120
    %v122 = vpop.f32.mrf.mxu0
    %v123 = vpop.f32.mrf.mxu0
    %v124 = vadd.f32 0.0, %v123
    %v125 = vpop.f32.mrf.mxu0
    %126 = vmatprep.mubr.bf16.mxu0 0
    %127 = vmatmul.mubr.bf16.gmra.mxu0 %v73
    %v128 = vpop.f32.mrf.mxu0
    %v129 = vadd.f32 0.0, %v128
    %v130 = vpop.f32.mrf.mxu0
    %v131 = vpop.f32.mrf.mxu0
    %v132 = vadd.f32 0.0, %v131
    %v133 = vpop.f32.mrf.mxu0
    %134 = vdwg.mxu0
    %v135 = vadd.f32 %v82, %v121
    %v136 = vadd.f32 %v83, %v124
    %v137 = vadd.f32 %v84, %v129
    %v138 = vadd.f32 %v85, %v132
    %139 = vst [vmem:[#allocation2] sm:$0xff] %v135
    %140 = vst [vmem:[#allocation2 + $0x8] sm:$0xff] %v136
    %141 = vst [vmem:[#allocation2 + $0x10] sm:$0xff] %v137
    %142 = vst [vmem:[#allocation2 + $0x18] sm:$0xff] %v138
    // Predicated region
    $region26: #{tpu_custom_call.1} parent=1 // pred_check
      %p143 = pneg %p44
    $region27: #{tpu_custom_call.1} parent=1 // pred_check_branch
      %145 = sbr.rel (%p143) target = $region29
    $region28: #{tpu_custom_call.1} parent=1 // pred_region
      %v146 = vld [vmem:[#allocation2] sm:$0xff]
      %v147 = vld [vmem:[#allocation2 + $0x8] sm:$0xff]
      %v148 = vld [vmem:[#allocation2 + $0x10] sm:$0xff]
      %v149 = vld [vmem:[#allocation2 + $0x18] sm:$0xff]
      %v150 = vld [vmem:[%s2] sm:$0x1]
      %v152 = vlaneseq
      %v153 = vshrl.u32 %v152, 7
      %v154 = vsub.s32 0, %v153
      %v155 = vrot.slane %v150, %v154
      %v157 = vadd.f32 %v146, %v155
      %v158 = vadd.f32 %v147, %v155
      %v159 = vadd.f32 %v148, %v155
      %v160 = vadd.f32 %v149, %v155
      %v161 = vmax.f32 %v157, 0.0
      %v162 = vmax.f32 %v158, 0.0
      %v163 = vmax.f32 %v159, 0.0
      %v164 = vmax.f32 %v160, 0.0
      %165 = vst [vmem:[#allocation8] sm:$0xff] %v161
      %166 = vst [vmem:[#allocation8 + $0x8] sm:$0xff] %v162
      %167 = vst [vmem:[#allocation8 + $0x10] sm:$0xff] %v163
      %168 = vst [vmem:[#allocation8 + $0x18] sm:$0xff] %v164
    $region29: #{tpu_custom_call.1} parent=1 // pred_fallthru
      _
    // Predicated region
    $region30: #{tpu_custom_call.1} parent=1 // pred_check
      _
    $region31: #{tpu_custom_call.1} parent=1 // pred_check_branch
      %170 = sbr.rel (0) target = $region33
    $region32: #{tpu_custom_call.1} parent=1 // pred_region
      %s172 = ssub.s32 512, 512
      %173 = vsyncadd [#allocation5], %s172
      %s174 = sshll.u32 [#allocation8], 4
      %s175 = int_to_ptr.vmem [resolvable:$true] %s174
      %180 = dma.vmem_to_hbm [thread:$0]  %s175, 512, %s3, [#allocation5], 128, 128, 8
    $region33: #{tpu_custom_call.1} parent=1 // pred_fallthru
      _
    // Predicated region
    $region34: #{tpu_custom_call.1} parent=1 // pred_check
      _
    $region35: #{tpu_custom_call.1} parent=1 // pred_check_branch
      %182 = sbr.rel (0) target = $region37
    $region36: #{tpu_custom_call.1} parent=1 // pred_region
      %183 = dma.done [#allocation5], 512
    $region37: #{tpu_custom_call.1} parent=1 // pred_fallthru
      _
    %184 = vsyncpa [#allocation4], 1
    %185 = vsyncpa [#allocation7], 1
    %186 = vsyncpa [#allocation5], 1

</llo_original>
